<compile_context>
chip_gen: v6e
topology: v6e:2x2x1
jax: 0.10.0
libtpu: 0.0.40
codegen_flags: <defaults>
</compile_context>

<pallas_src>
import functools

import jax
import jax.numpy as jnp
from jax.experimental import pallas as pl
from jax.experimental.pallas import tpu as pltpu


def _channel_attention_kernel(x_ref, w1t_ref, b1_ref, w2t_ref, b2_ref,
                              out_ref, acc_ref, *, inv_hw):
    # x_ref:   (tB, C, tHW)   current spatial tile
    # w1t_ref: (C, Ch), b1_ref: (1, Ch), w2t_ref: (Ch, C), b2_ref: (1, C)
    # out_ref: (tB, C)
    # acc_ref: (tB, C) f32 scratch accumulator (persists across HW grid steps)
    hw = pl.program_id(1)

    @pl.when(hw == 0)
    def _():
        acc_ref[...] = jnp.zeros_like(acc_ref)

    # Partial spatial sum of this tile, accumulated in f32 (no materialized cast,
    # no per-tile divide).
    acc_ref[...] += jnp.sum(x_ref[...], axis=-1, dtype=jnp.float32)

    # Epilogue: runs exactly once, at the last HW tile.
    @pl.when(hw == pl.num_programs(1) - 1)
    def _():
        gap = acc_ref[...] * inv_hw                                   # (tB, C)
        h = jnp.dot(gap, w1t_ref[...],
                    preferred_element_type=jnp.float32) + b1_ref[...]  # (tB, Ch)
        h = jnp.maximum(h, 0.0)
        o = jnp.dot(h, w2t_ref[...],
                    preferred_element_type=jnp.float32) + b2_ref[...]  # (tB, C)
        out_ref[...] = o.astype(out_ref.dtype)


def _choose_tiles(B, C, HW, itemsize,
                  vmem_budget_bytes=8 * 1024 * 1024, max_hw_tile=4096):
    """Pick (tB, tHW, padded_HW): lane-dense tHW (multiple of 128) whose
    double-buffered x tile stays within a conservative per-buffer VMEM budget
    (safe for v7x's 64 MiB VMEM)."""
    tB = 8 if (B % 8 == 0) else B
    by_budget = vmem_budget_bytes // max(1, tB * C * itemsize)
    max_t = max(128, min(max_hw_tile, (by_budget // 128) * 128))
    # Prefer a tile that divides HW exactly (no padding copy needed).
    t = max_t
    while t >= 128:
        if HW % t == 0:
            return tB, t, HW
        t -= 128
    # Fallback: pad the spatial axis with zeros (sum is unaffected; we divide
    # by the true HW).
    t = min(max_t, ((HW + 127) // 128) * 128)
    hw_pad = ((HW + t - 1) // t) * t
    return tB, t, hw_pad


def channel_attention(x, w1, b1, w2, b2):
    """x: (B, C, H, W) NCHW. w1: (Ch, C), b1: (Ch,), w2: (C, Ch), b2: (C,).
    Returns (B, C, 1, 1), equivalent to PyTorch ChannelAttention.forward."""
    B, C, H, W = x.shape
    Ch = w1.shape[0]
    HW = H * W
    itemsize = jnp.dtype(x.dtype).itemsize

    tB, tHW, HW_pad = _choose_tiles(B, C, HW, itemsize)

    x_flat = x.reshape(B, C, HW)
    if HW_pad != HW:
        x_flat = jnp.pad(x_flat, ((0, 0), (0, 0), (0, HW_pad - HW)))

    w1t = jnp.transpose(w1)          # (C, Ch)
    w2t = jnp.transpose(w2)          # (Ch, C)
    b1_2d = b1.reshape(1, Ch)
    b2_2d = b2.reshape(1, C)

    grid = (B // tB, HW_pad // tHW)

    kernel = functools.partial(_channel_attention_kernel, inv_hw=1.0 / float(HW))

    flops = B * C * HW + 4 * B * C * Ch          # streaming sum + two tiny matmuls
    bytes_accessed = (B * C * HW_pad * itemsize  # one full read of x
                      + (2 * C * Ch + C + Ch) * 4
                      + B * C * itemsize)

    out = pl.pallas_call(
        kernel,
        out_shape=jax.ShapeDtypeStruct((B, C), x.dtype),
        grid_spec=pltpu.PrefetchScalarGridSpec(
            num_scalar_prefetch=0,
            grid=grid,
            in_specs=[
                # Streaming x tiles.
                pl.BlockSpec((tB, C, tHW), lambda b, hw: (b, 0, hw)),
                # Tiny weights/biases: constant block index -> DMA'd once, resident.
                pl.BlockSpec((C, Ch), lambda b, hw: (0, 0)),
                pl.BlockSpec((1, Ch), lambda b, hw: (0, 0)),
                pl.BlockSpec((Ch, C), lambda b, hw: (0, 0)),
                pl.BlockSpec((1, C), lambda b, hw: (0, 0)),
            ],
            out_specs=pl.BlockSpec((tB, C), lambda b, hw: (b, 0)),
            scratch_shapes=[pltpu.VMEM((tB, C), jnp.float32)],
        ),
        compiler_params=pltpu.CompilerParams(
            dimension_semantics=("parallel", "arbitrary")),
        cost_estimate=pl.CostEstimate(
            flops=flops, transcendentals=0, bytes_accessed=bytes_accessed),
    )(x_flat, w1t, b1_2d, w2t, b2_2d)

    return out.reshape(B, C, 1, 1)


def _reference(x, w1, b1, w2, b2):
    # Pure-JAX reference of the PyTorch forward.
    gap = jnp.mean(x, axis=(2, 3))                       # (B, C)
    h = jnp.maximum(gap @ w1.T + b1, 0.0)                # (B, Ch)
    o = h @ w2.T + b2                                    # (B, C)
    return o[:, :, None, None]


if __name__ == "__main__":
    # Module config: dim must be divisible by reduction=8 for a nonzero hidden dim.
    dim, reduction = 32, 8
    hidden = dim // reduction
    B, H, W = 2, 16, 16

    key = jax.random.PRNGKey(0)
    kx, kw1, kb1, kw2, kb2 = jax.random.split(key, 5)

    x = jax.random.normal(kx, (B, dim, H, W), dtype=jnp.float32)

    # Conv2d 1x1 weights squeezed to 2D:
    #   conv1.weight: (hidden, dim, 1, 1) -> (hidden, dim), conv1.bias: (hidden,)
    #   conv2.weight: (dim, hidden, 1, 1) -> (dim, hidden), conv2.bias: (dim,)
    w1 = jax.random.normal(kw1, (hidden, dim), dtype=jnp.float32) * 0.1
    b1 = jax.random.normal(kb1, (hidden,), dtype=jnp.float32) * 0.1
    w2 = jax.random.normal(kw2, (dim, hidden), dtype=jnp.float32) * 0.1
    b2 = jax.random.normal(kb2, (dim,), dtype=jnp.float32) * 0.1

    out = channel_attention(x, w1, b1, w2, b2)
    out = jax.block_until_ready(out)

    ref = _reference(x, w1, b1, w2, b2)
    assert out.shape == (B, dim, 1, 1), out.shape
    assert jnp.allclose(out, ref, atol=1e-5, rtol=1e-5), "mismatch vs reference"

    print("KERNEL_OK")
</pallas_src>

<mosaic_0001>
module attributes {stable_mosaic.version = 11 : i64} {
  func.func @_channel_attention_kernel(%arg0: i32, %arg1: i32, %arg2: memref<2x32x256xf32, #tpu.memory_space<vmem>>, %arg3: memref<32x4xf32, #tpu.memory_space<vmem>>, %arg4: memref<1x4xf32, #tpu.memory_space<vmem>>, %arg5: memref<4x32xf32, #tpu.memory_space<vmem>>, %arg6: memref<1x32xf32, #tpu.memory_space<vmem>>, %arg7: memref<2x32xf32, #tpu.memory_space<vmem>>, %arg8: memref<2x32xf32, #tpu.memory_space<vmem>>) attributes {dimension_semantics = [#tpu.dimension_semantics<parallel>, #tpu.dimension_semantics<arbitrary>], iteration_bounds = array<i64: 1, 1>, scalar_prefetch = 0 : i64, scratch_operands = 1 : i64, tpu.core_type = #tpu.core_type<tc>, window_params = [{transform_indices = @transform_0, window_bounds = array<i64: 2, 32, 256>}, {pipeline_mode = #tpu.pipeline_mode<synchronous>, transform_indices = @transform_1, window_bounds = array<i64: 32, 4>}, {pipeline_mode = #tpu.pipeline_mode<synchronous>, transform_indices = @transform_2, window_bounds = array<i64: 1, 4>}, {pipeline_mode = #tpu.pipeline_mode<synchronous>, transform_indices = @transform_3, window_bounds = array<i64: 4, 32>}, {pipeline_mode = #tpu.pipeline_mode<synchronous>, transform_indices = @transform_4, window_bounds = array<i64: 1, 32>}, {transform_indices = @transform_5, window_bounds = array<i64: 2, 32>}]} {
    %c0_i32 = arith.constant 0 : i32
    %0 = arith.cmpi eq, %arg1, %c0_i32 : i32
    %1 = arith.extui %0 : i1 to i32
    %c0_i32_0 = arith.constant 0 : i32
    %2 = arith.cmpi ne, %1, %c0_i32_0 : i32
    scf.if %2 {
      %cst_9 = arith.constant 0.000000e+00 : f32
      %11 = vector.broadcast %cst_9 : f32 to vector<2x32xf32>
      %c0_10 = arith.constant 0 : index
      %c0_11 = arith.constant 0 : index
      %12 = vector.load %arg8[%c0_10, %c0_11] : memref<2x32xf32, #tpu.memory_space<vmem>>, vector<2x32xf32>
      tpu.vector_store %arg8[%c0_10, %c0_11], %11 {strides = array<i32>} : memref<2x32xf32, #tpu.memory_space<vmem>>, vector<2x32xf32>,
    } else {
    }
    %c0 = arith.constant 0 : index
    %c0_1 = arith.constant 0 : index
    %3 = vector.load %arg8[%c0, %c0_1] : memref<2x32xf32, #tpu.memory_space<vmem>>, vector<2x32xf32>
    %c0_2 = arith.constant 0 : index
    %c0_3 = arith.constant 0 : index
    %c0_4 = arith.constant 0 : index
    %4 = vector.load %arg2[%c0_2, %c0_3, %c0_4] : memref<2x32x256xf32, #tpu.memory_space<vmem>>, vector<2x32x256xf32>
    %cst = arith.constant dense<0.000000e+00> : vector<2x32xf32>
    %5 = vector.multi_reduction <add>, %4, %cst [2] : vector<2x32x256xf32> to vector<2x32xf32>
    %6 = arith.addf %3, %5 : vector<2x32xf32>
    %c0_5 = arith.constant 0 : index
    %c0_6 = arith.constant 0 : index
    %7 = vector.load %arg8[%c0_5, %c0_6] : memref<2x32xf32, #tpu.memory_space<vmem>>, vector<2x32xf32>
    tpu.vector_store %arg8[%c0_5, %c0_6], %6 {strides = array<i32>} : memref<2x32xf32, #tpu.memory_space<vmem>>, vector<2x32xf32>,
    %c0_i32_7 = arith.constant 0 : i32
    %8 = arith.cmpi eq, %arg1, %c0_i32_7 : i32
    %9 = arith.extui %8 : i1 to i32
    %c0_i32_8 = arith.constant 0 : i32
    %10 = arith.cmpi ne, %9, %c0_i32_8 : i32
    scf.if %10 {
      %c0_9 = arith.constant 0 : index
      %c0_10 = arith.constant 0 : index
      %11 = vector.load %arg8[%c0_9, %c0_10] : memref<2x32xf32, #tpu.memory_space<vmem>>, vector<2x32xf32>
      %cst_11 = arith.constant 3.906250e-03 : f32
      %12 = vector.broadcast %cst_11 : f32 to vector<2x32xf32>
      %13 = arith.mulf %11, %12 : vector<2x32xf32>
      %c0_12 = arith.constant 0 : index
      %c0_13 = arith.constant 0 : index
      %14 = vector.load %arg3[%c0_12, %c0_13] : memref<32x4xf32, #tpu.memory_space<vmem>>, vector<32x4xf32>
      %cst_14 = arith.constant dense<0.000000e+00> : vector<2x4xf32>
      %15 = tpu.matmul %13, %14, %cst_14 {dimension_numbers = #tpu.dot_dimension_numbers<[1], [0], [0], [1], [0, 0, 1, 1], [], []>} : vector<2x32xf32>, vector<32x4xf32>, vector<2x4xf32> -> vector<2x4xf32>
      %c0_15 = arith.constant 0 : index
      %c0_16 = arith.constant 0 : index
      %16 = vector.load %arg4[%c0_15, %c0_16] : memref<1x4xf32, #tpu.memory_space<vmem>>, vector<1x4xf32>
      %17 = vector.broadcast %16 : vector<1x4xf32> to vector<2x4xf32>
      %18 = arith.addf %15, %17 : vector<2x4xf32>
      %cst_17 = arith.constant 0.000000e+00 : f32
      %19 = vector.broadcast %cst_17 : f32 to vector<2x4xf32>
      %20 = arith.maximumf %18, %19 : vector<2x4xf32>
      %c0_18 = arith.constant 0 : index
      %c0_19 = arith.constant 0 : index
      %21 = vector.load %arg5[%c0_18, %c0_19] : memref<4x32xf32, #tpu.memory_space<vmem>>, vector<4x32xf32>
      %cst_20 = arith.constant dense<0.000000e+00> : vector<2x32xf32>
      %22 = tpu.matmul %20, %21, %cst_20 {dimension_numbers = #tpu.dot_dimension_numbers<[1], [0], [0], [1], [0, 0, 1, 1], [], []>} : vector<2x4xf32>, vector<4x32xf32>, vector<2x32xf32> -> vector<2x32xf32>
      %c0_21 = arith.constant 0 : index
      %c0_22 = arith.constant 0 : index
      %23 = vector.load %arg6[%c0_21, %c0_22] : memref<1x32xf32, #tpu.memory_space<vmem>>, vector<1x32xf32>
      %24 = vector.broadcast %23 : vector<1x32xf32> to vector<2x32xf32>
      %25 = arith.addf %22, %24 : vector<2x32xf32>
      %c0_23 = arith.constant 0 : index
      %c0_24 = arith.constant 0 : index
      %26 = vector.load %arg7[%c0_23, %c0_24] : memref<2x32xf32, #tpu.memory_space<vmem>>, vector<2x32xf32>
      tpu.vector_store %arg7[%c0_23, %c0_24], %25 {strides = array<i32>} : memref<2x32xf32, #tpu.memory_space<vmem>>, vector<2x32xf32>,
    } else {
    }
    return
  }
  func.func @transform_0(%arg0: i32, %arg1: i32) -> (i32, i32, i32) {
    %c0_i32 = arith.constant 0 : i32
    %c0_i32_0 = arith.constant 0 : i32
    return %arg0, %c0_i32, %arg1 : i32, i32, i32
  }
  func.func @transform_1(%arg0: i32, %arg1: i32) -> (i32, i32) {
    %c0_i32 = arith.constant 0 : i32
    %c0_i32_0 = arith.constant 0 : i32
    %c0_i32_1 = arith.constant 0 : i32
    return %c0_i32, %c0_i32_0 : i32, i32
  }
  func.func @transform_2(%arg0: i32, %arg1: i32) -> (i32, i32) {
    %c0_i32 = arith.constant 0 : i32
    %c0_i32_0 = arith.constant 0 : i32
    %c0_i32_1 = arith.constant 0 : i32
    return %c0_i32, %c0_i32_0 : i32, i32
  }
  func.func @transform_3(%arg0: i32, %arg1: i32) -> (i32, i32) {
    %c0_i32 = arith.constant 0 : i32
    %c0_i32_0 = arith.constant 0 : i32
    %c0_i32_1 = arith.constant 0 : i32
    return %c0_i32, %c0_i32_0 : i32, i32
  }
  func.func @transform_4(%arg0: i32, %arg1: i32) -> (i32, i32) {
    %c0_i32 = arith.constant 0 : i32
    %c0_i32_0 = arith.constant 0 : i32
    %c0_i32_1 = arith.constant 0 : i32
    return %c0_i32, %c0_i32_0 : i32, i32
  }
  func.func @transform_5(%arg0: i32, %arg1: i32) -> (i32, i32) {
    %c0_i32 = arith.constant 0 : i32
    %c0_i32_0 = arith.constant 0 : i32
    return %arg0, %c0_i32 : i32, i32
  }
}

</mosaic_0001>

<llo_original>
// kernel: tpu_custom_call.1
$region0: #{tpu_custom_call.1}
  #allocation0 [shape = 'u32[]', space=smem, size = 0x4, offset = 0x4, fixed_abs, tag = 'smem constant byte address 0x4 - core index']
  #allocation1 [shape = 'u32[144,128]{1,0:T(1,128)}', space=vmem, size = 0x12000, scoped, tag = 'internal scratch']
  #allocation2 [shape = 'f32[2,32]{1,0:T(2,128)}', space=vmem, size = 0x400, scoped, tag = 'scratch operand']
  %s0 = inlined_call_operand.hbm [shape: f32[2,32,256], index: 0, kind: input, shape index: {}]
  %s1 = inlined_call_operand.vmem [shape: f32[32,4], index: 1, kind: input, shape index: {}]
  %s2 = inlined_call_operand.vmem [shape: f32[1,4], index: 2, kind: input, shape index: {}]
  %s3 = inlined_call_operand.vmem [shape: f32[4,32], index: 3, kind: input, shape index: {}]
  %s4 = inlined_call_operand.vmem [shape: f32[1,32], index: 4, kind: input, shape index: {}]
  %s5 = inlined_call_operand.hbm [shape: f32[2,32], index: 5, kind: output, shape index: {}]
  %s6 = sld [smem:[#allocation0]]
  $region42: #{tpu_custom_call.1} parent=0
    _
  %s8 = ssub.s32 1, %s6
  %s9 = scalar_select 0, %s8, %s6
  $region1: #{tpu_custom_call.1} parent=0
    #allocation3 [shape = 'u8[65536]{0}', space=vmem, size = 0x10000, scoped, tag = 'input window, operand 0, single buffered']
    #allocation4 [shape = 's32[1]{0}', space=sflag, size = 0x4, scoped, tag = 'scoped memory for tpu_custom_call.1']
    #allocation5 [shape = 's32[1]{0}', space=sflag, size = 0x4, scoped, tag = 'scoped memory for tpu_custom_call.1']
    #allocation6 [shape = 'u8[1024]{0}', space=vmem, size = 0x400, scoped, tag = 'output window, operand 0, single buffered']
    %10 = vsyncpa [#allocation4], 0
    %11 = vsyncpa [#allocation5], 0
    // Predicated region
    $region2: #{tpu_custom_call.1} parent=1 // pred_check
      _
    $region3: #{tpu_custom_call.1} parent=1 // pred_check_branch
      %13 = sbr.rel (0) target = $region5
    $region4: #{tpu_custom_call.1} parent=1 // pred_region
      %s15 = ssub.s32 2048, 2048
      %16 = vsyncadd [#allocation4], %s15
      %s17 = sshll.u32 [#allocation3], 4
      %s18 = int_to_ptr.vmem [resolvable:$true] %s17
      %23 = dma.hbm_to_vmem [thread:$0]  %s0, 2048, %s18, [#allocation4], 256, 256, 16
    $region5: #{tpu_custom_call.1} parent=1 // pred_fallthru
      _
    // Predicated region
    $region6: #{tpu_custom_call.1} parent=1 // pred_check
      _
    $region7: #{tpu_custom_call.1} parent=1 // pred_check_branch
      %25 = sbr.rel (0) target = $region9
    $region8: #{tpu_custom_call.1} parent=1 // pred_region
      _
    $region9: #{tpu_custom_call.1} parent=1 // pred_fallthru
      _
    // Predicated region
    $region10: #{tpu_custom_call.1} parent=1 // pred_check
      _
    $region11: #{tpu_custom_call.1} parent=1 // pred_check_branch
      %27 = sbr.rel (0) target = $region13
    $region12: #{tpu_custom_call.1} parent=1 // pred_region
      _
    $region13: #{tpu_custom_call.1} parent=1 // pred_fallthru
      _
    // Predicated region
    $region14: #{tpu_custom_call.1} parent=1 // pred_check
      _
    $region15: #{tpu_custom_call.1} parent=1 // pred_check_branch
      %29 = sbr.rel (0) target = $region17
    $region16: #{tpu_custom_call.1} parent=1 // pred_region
      _
    $region17: #{tpu_custom_call.1} parent=1 // pred_fallthru
      _
    // Predicated region
    $region18: #{tpu_custom_call.1} parent=1 // pred_check
      _
    $region19: #{tpu_custom_call.1} parent=1 // pred_check_branch
      %31 = sbr.rel (0) target = $region21
    $region20: #{tpu_custom_call.1} parent=1 // pred_region
      _
    $region21: #{tpu_custom_call.1} parent=1 // pred_fallthru
      _
    // Predicated region
    $region22: #{tpu_custom_call.1} parent=1 // pred_check
      _
    $region23: #{tpu_custom_call.1} parent=1 // pred_check_branch
      %33 = sbr.rel (0) target = $region25
    $region24: #{tpu_custom_call.1} parent=1 // pred_region
      %34 = dma.done [#allocation4], 2048
    $region25: #{tpu_custom_call.1} parent=1 // pred_fallthru
      _
    %p35 = scmp.eq.s32.totalorder 0, 0
    // Predicated region
    $region26: #{tpu_custom_call.1} parent=1 // pred_check
      %p36 = pneg %p35
    $region27: #{tpu_custom_call.1} parent=1 // pred_check_branch
      %38 = sbr.rel (%p36) target = $region29
    $region28: #{tpu_custom_call.1} parent=1 // pred_region
      %vm39 = vcmask 254976
      %40 = vst.msk [vmem:[#allocation2] sm:$0x3] %vm39, 0.0
    $region29: #{tpu_custom_call.1} parent=1 // pred_fallthru
      _
    %v41 = vld [vmem:[#allocation2] sm:$0x3]
    %v42 = vld [vmem:[#allocation3] sm:$0xff]
    %v43 = vld [vmem:[#allocation3 + $0x8] sm:$0xff]
    %v44 = vld [vmem:[#allocation3 + $0x10] sm:$0xff]
    %v45 = vld [vmem:[#allocation3 + $0x18] sm:$0xff]
    %v46 = vld [vmem:[#allocation3 + $0x20] sm:$0xff]
    %v47 = vld [vmem:[#allocation3 + $0x28] sm:$0xff]
    %v48 = vld [vmem:[#allocation3 + $0x30] sm:$0xff]
    %v49 = vld [vmem:[#allocation3 + $0x38] sm:$0xff]
    %v50 = vld [vmem:[#allocation3 + $0x40] sm:$0xff]
    %v51 = vld [vmem:[#allocation3 + $0x48] sm:$0xff]
    %v52 = vld [vmem:[#allocation3 + $0x50] sm:$0xff]
    %v53 = vld [vmem:[#allocation3 + $0x58] sm:$0xff]
    %v54 = vld [vmem:[#allocation3 + $0x60] sm:$0xff]
    %v55 = vld [vmem:[#allocation3 + $0x68] sm:$0xff]
    %v56 = vld [vmem:[#allocation3 + $0x70] sm:$0xff]
    %v57 = vld [vmem:[#allocation3 + $0x78] sm:$0xff]
    %v58 = vadd.f32 %v42, %v43
    %59 = vadd.xlane.f32.xlu0 %v58
    %v60 = vpop.xlane.xlu0 %59
    %v61 = vadd.f32 %v44, %v45
    %62 = vadd.xlane.f32.xlu0 %v61
    %v63 = vpop.xlane.xlu0 %62
    %v64 = vadd.f32 %v46, %v47
    %65 = vadd.xlane.f32.xlu0 %v64
    %v66 = vpop.xlane.xlu0 %65
    %v67 = vadd.f32 %v48, %v49
    %68 = vadd.xlane.f32.xlu0 %v67
    %v69 = vpop.xlane.xlu0 %68
    %v70 = vadd.f32 %v50, %v51
    %71 = vadd.xlane.f32.xlu0 %v70
    %v72 = vpop.xlane.xlu0 %71
    %v73 = vadd.f32 %v52, %v53
    %74 = vadd.xlane.f32.xlu0 %v73
    %v75 = vpop.xlane.xlu0 %74
    %v76 = vadd.f32 %v54, %v55
    %77 = vadd.xlane.f32.xlu0 %v76
    %v78 = vpop.xlane.xlu0 %77
    %v79 = vadd.f32 %v56, %v57
    %80 = vadd.xlane.f32.xlu0 %v79
    %v81 = vpop.xlane.xlu0 %80
    %v90 = vlaneseq
    %v91 = vand.u32 %v90, 127
    %v92 = vlaneseq
    %v93 = vshrl.u32 %v92, 7
    %v94 = vsub.s32 %v91, %v93
    %v95 = vrot.slane %v60, %v94
    %v96 = vadd.s32 %v91, 4294967288
    %v97 = vlaneseq
    %v98 = vshrl.u32 %v97, 7
    %v99 = vsub.s32 %v96, %v98
    %v100 = vrot.slane %v63, %v99
    %vm101 = vcmask 130112
    %v102 = vsel %vm101, %v100, %v95
    %v103 = vadd.s32 %v91, 4294967280
    %v104 = vlaneseq
    %v105 = vshrl.u32 %v104, 7
    %v106 = vsub.s32 %v103, %v105
    %v107 = vrot.slane %v66, %v106
    %vm108 = vcmask 195712
    %v109 = vsel %vm108, %v107, %v102
    %v110 = vadd.s32 %v91, 4294967272
    %v111 = vlaneseq
    %v112 = vshrl.u32 %v111, 7
    %v113 = vsub.s32 %v110, %v112
    %v114 = vrot.slane %v69, %v113
    %vm115 = vcmask 261312
    %v116 = vsel %vm115, %v114, %v109
    %v117 = vlaneseq
    %v118 = vshrl.u32 %v117, 7
    %v119 = vsub.s32 %v91, %v118
    %v120 = vrot.slane %v72, %v119
    %v121 = vlaneseq
    %v122 = vshrl.u32 %v121, 7
    %v123 = vsub.s32 %v96, %v122
    %v124 = vrot.slane %v75, %v123
    %v125 = vsel %vm101, %v124, %v120
    %v126 = vlaneseq
    %v127 = vshrl.u32 %v126, 7
    %v128 = vsub.s32 %v103, %v127
    %v129 = vrot.slane %v78, %v128
    %v130 = vsel %vm108, %v129, %v125
    %v131 = vlaneseq
    %v132 = vshrl.u32 %v131, 7
    %v133 = vsub.s32 %v110, %v132
    %v134 = vrot.slane %v81, %v133
    %v135 = vsel %vm115, %v134, %v130
    %vm136 = vcmask 1041409
    %v137 = vsel %vm136, %v135, %v116
    %v139 = vadd.f32 %v41, %v137
    %vm140 = vcmask 254976
    %141 = vst.msk [vmem:[#allocation2] sm:$0x3] %vm140, %v139
    // Predicated region
    $region30: #{tpu_custom_call.1} parent=1 // pred_check
      %p142 = pneg %p35
    $region31: #{tpu_custom_call.1} parent=1 // pred_check_branch
      %144 = sbr.rel (%p142) target = $region33
    $region32: #{tpu_custom_call.1} parent=1 // pred_region
      %v145 = vld [vmem:[#allocation2] sm:$0x3]
      %v146 = vmul.f32 %v145, 0.00390625
      %v147 = vld [vmem:[%s1] sm:$0xff]
      %v148 = vld [vmem:[%s1 + $0x8] sm:$0xff]
      %v149 = vld [vmem:[%s1 + $0x10] sm:$0xff]
      %v150 = vld [vmem:[%s1 + $0x18] sm:$0xff]
      %v151 = vld [vmem:[%s2] sm:$0x1]
      %v153 = vlaneseq
      %v154 = vshrl.u32 %v153, 7
      %v155 = vsub.s32 0, %v154
      %v156 = vrot.slane %v151, %v155
      %vm158 = vcmask 261120
      %v160 = vsel %vm158, %v146, 0
      %162 = vmatprep.subr.mxu0 0.0
      %163 = vmatpush1.msra.mxu0 0.0
      %164 = vmatprep.subr.mxu0 0.0
      %165 = vmatpush1.msra.mxu0 0.0
      %166 = vmatprep.subr.mxu0 0.0
      %167 = vmatpush1.msra.mxu0 0.0
      %168 = vmatprep.subr.mxu0 0.0
      %169 = vmatpush1.msra.mxu0 0.0
      %170 = vmatprep.subr.mxu0 0.0
      %171 = vmatpush1.msra.mxu0 0.0
      %172 = vmatprep.subr.mxu0 0.0
      %173 = vmatpush1.msra.mxu0 0.0
      %174 = vmatprep.subr.mxu0 0.0
      %175 = vmatpush1.msra.mxu0 0.0
      %176 = vmatprep.subr.mxu0 0.0
      %177 = vmatpush1.msra.mxu0 0.0
      %178 = vmatprep.subr.mxu0 0.0
      %179 = vmatpush1.msra.mxu0 0.0
      %180 = vmatprep.subr.mxu0 0.0
      %181 = vmatpush1.msra.mxu0 0.0
      %182 = vmatprep.subr.mxu0 0.0
      %183 = vmatpush1.msra.mxu0 0.0
      %184 = vmatprep.subr.mxu0 0.0
      %185 = vmatpush1.msra.mxu0 0.0
      %186 = vmatprep.subr.mxu0 0.0
      %187 = vmatpush1.msra.mxu0 %v150
      %188 = vmatprep.subr.mxu0 0.0
      %189 = vmatpush1.msra.mxu0 %v149
      %190 = vmatprep.subr.mxu0 0.0
      %191 = vmatpush1.msra.mxu0 %v148
      %192 = vmatprep.subr.mxu0 0.0
      %193 = vmatpush1.msra.mxu0 %v147
      %194 = vmatprep.subr.mxu0 0.0
      %195 = vmatpush2.msra.mxu0 0.0
      %196 = vmatprep.subr.mxu0 0.0
      %197 = vmatpush2.msra.mxu0 0.0
      %198 = vmatprep.subr.mxu0 0.0
      %199 = vmatpush2.msra.mxu0 0.0
      %200 = vmatprep.subr.mxu0 0.0
      %201 = vmatpush2.msra.mxu0 0.0
      %202 = vmatprep.subr.mxu0 0.0
      %203 = vmatpush2.msra.mxu0 0.0
      %204 = vmatprep.subr.mxu0 0.0
      %205 = vmatpush2.msra.mxu0 0.0
      %206 = vmatprep.subr.mxu0 0.0
      %207 = vmatpush2.msra.mxu0 0.0
      %208 = vmatprep.subr.mxu0 0.0
      %209 = vmatpush2.msra.mxu0 0.0
      %210 = vmatprep.subr.mxu0 0.0
      %211 = vmatpush2.msra.mxu0 0.0
      %212 = vmatprep.subr.mxu0 0.0
      %213 = vmatpush2.msra.mxu0 0.0
      %214 = vmatprep.subr.mxu0 0.0
      %215 = vmatpush2.msra.mxu0 0.0
      %216 = vmatprep.subr.mxu0 0.0
      %217 = vmatpush2.msra.mxu0 0.0
      %218 = vmatprep.subr.mxu0 0.0
      %219 = vmatpush2.msra.mxu0 0.0
      %220 = vmatprep.subr.mxu0 0.0
      %221 = vmatpush2.msra.mxu0 0.0
      %222 = vmatprep.subr.mxu0 0.0
      %223 = vmatpush2.msra.mxu0 0.0
      %224 = vmatprep.subr.mxu0 0.0
      %225 = vmatpush2.msra.mxu0 0.0
      %226 = vmatprep.mubr.f32.mxu0 0.0
      %227 = vmatmul.mubr.f32.gmra.mxu0 %v160
      %v228 = vpop.f32.mrf.mxu0
      %v229 = vadd.f32 %v156, %v228
      %v230 = vpop.f32.mrf.mxu0
      %231 = vdwg.mxu0
      %v232 = vmax.f32 %v229, 0.0
      %v233 = vld [vmem:[%s3] sm:$0xf]
      %v234 = vld [vmem:[%s4] sm:$0x1]
      %v236 = vlaneseq
      %v237 = vshrl.u32 %v236, 7
      %v238 = vsub.s32 0, %v237
      %v239 = vrot.slane %v234, %v238
      %vm241 = vcmask 31744
      %v243 = vsel %vm241, %v232, 0
      %vm245 = vcmask 1043456
      %v247 = vsel %vm245, %v233, 0
      %249 = vmatprep.subr.mxu0 0.0
      %250 = vmatpush1.msra.mxu0 0.0
      %251 = vmatprep.subr.mxu0 0.0
      %252 = vmatpush1.msra.mxu0 0.0
      %253 = vmatprep.subr.mxu0 0.0
      %254 = vmatpush1.msra.mxu0 0.0
      %255 = vmatprep.subr.mxu0 0.0
      %256 = vmatpush1.msra.mxu0 0.0
      %257 = vmatprep.subr.mxu0 0.0
      %258 = vmatpush1.msra.mxu0 0.0
      %259 = vmatprep.subr.mxu0 0.0
      %260 = vmatpush1.msra.mxu0 0.0
      %261 = vmatprep.subr.mxu0 0.0
      %262 = vmatpush1.msra.mxu0 0.0
      %263 = vmatprep.subr.mxu0 0.0
      %264 = vmatpush1.msra.mxu0 0.0
      %265 = vmatprep.subr.mxu0 0.0
      %266 = vmatpush1.msra.mxu0 0.0
      %267 = vmatprep.subr.mxu0 0.0
      %268 = vmatpush1.msra.mxu0 0.0
      %269 = vmatprep.subr.mxu0 0.0
      %270 = vmatpush1.msra.mxu0 0.0
      %271 = vmatprep.subr.mxu0 0.0
      %272 = vmatpush1.msra.mxu0 0.0
      %273 = vmatprep.subr.mxu0 0.0
      %274 = vmatpush1.msra.mxu0 0.0
      %275 = vmatprep.subr.mxu0 0.0
      %276 = vmatpush1.msra.mxu0 0.0
      %277 = vmatprep.subr.mxu0 0.0
      %278 = vmatpush1.msra.mxu0 0.0
      %279 = vmatprep.subr.mxu0 0.0
      %280 = vmatpush1.msra.mxu0 %v247
      %281 = vmatprep.subr.mxu0 0.0
      %282 = vmatpush2.msra.mxu0 0.0
      %283 = vmatprep.subr.mxu0 0.0
      %284 = vmatpush2.msra.mxu0 0.0
      %285 = vmatprep.subr.mxu0 0.0
      %286 = vmatpush2.msra.mxu0 0.0
      %287 = vmatprep.subr.mxu0 0.0
      %288 = vmatpush2.msra.mxu0 0.0
      %289 = vmatprep.subr.mxu0 0.0
      %290 = vmatpush2.msra.mxu0 0.0
      %291 = vmatprep.subr.mxu0 0.0
      %292 = vmatpush2.msra.mxu0 0.0
      %293 = vmatprep.subr.mxu0 0.0
      %294 = vmatpush2.msra.mxu0 0.0
      %295 = vmatprep.subr.mxu0 0.0
      %296 = vmatpush2.msra.mxu0 0.0
      %297 = vmatprep.subr.mxu0 0.0
      %298 = vmatpush2.msra.mxu0 0.0
      %299 = vmatprep.subr.mxu0 0.0
      %300 = vmatpush2.msra.mxu0 0.0
      %301 = vmatprep.subr.mxu0 0.0
      %302 = vmatpush2.msra.mxu0 0.0
      %303 = vmatprep.subr.mxu0 0.0
      %304 = vmatpush2.msra.mxu0 0.0
      %305 = vmatprep.subr.mxu0 0.0
      %306 = vmatpush2.msra.mxu0 0.0
      %307 = vmatprep.subr.mxu0 0.0
      %308 = vmatpush2.msra.mxu0 0.0
      %309 = vmatprep.subr.mxu0 0.0
      %310 = vmatpush2.msra.mxu0 0.0
      %311 = vmatprep.subr.mxu0 0.0
      %312 = vmatpush2.msra.mxu0 0.0
      %313 = vmatprep.mubr.f32.mxu0 0.0
      %314 = vmatmul.mubr.f32.gmra.mxu0 %v243
      %v315 = vpop.f32.mrf.mxu0
      %v316 = vadd.f32 %v239, %v315
      %v317 = vpop.f32.mrf.mxu0
      %318 = vdwg.mxu0
      %319 = vst.msk [vmem:[#allocation6] sm:$0x3] %vm140, %v316
    $region33: #{tpu_custom_call.1} parent=1 // pred_fallthru
      _
    // Predicated region
    $region34: #{tpu_custom_call.1} parent=1 // pred_check
      _
    $region35: #{tpu_custom_call.1} parent=1 // pred_check_branch
      %321 = sbr.rel (0) target = $region37
    $region36: #{tpu_custom_call.1} parent=1 // pred_region
      %s323 = ssub.s32 32, 32
      %324 = vsyncadd [#allocation5], %s323
      %s326 = sshll.u32 [#allocation6], 4
      %s327 = int_to_ptr.vmem [resolvable:$true] %s326
      %329 = dma.vmem_to_hbm [thread:$0]  %s327, 32, %s5, [#allocation5]
    $region37: #{tpu_custom_call.1} parent=1 // pred_fallthru
      _
    // Predicated region
    $region38: #{tpu_custom_call.1} parent=1 // pred_check
      _
    $region39: #{tpu_custom_call.1} parent=1 // pred_check_branch
      %331 = sbr.rel (0) target = $region41
    $region40: #{tpu_custom_call.1} parent=1 // pred_region
      %332 = dma.done [#allocation5], 32
    $region41: #{tpu_custom_call.1} parent=1 // pred_fallthru
      _
    %333 = vsyncpa [#allocation4], 1
    %334 = vsyncpa [#allocation5], 1

</llo_original>
